<compile_context>
chip_gen: v6e
topology: v6e:2x2x1
jax: 0.10.0
libtpu: 0.0.40
codegen_flags: <defaults>
</compile_context>

<pallas_src>
import numpy as np
import jax
import jax.numpy as jnp
from jax import lax
from jax.experimental import pallas as pl
from jax.experimental.pallas import tpu as pltpu

KERNEL_MUL = 2.0
KERNEL_NUM = 5
FIX_SIGMA = None          # matches the PyTorch __init__ default
_VMEM_BUDGET = 28 * 1024 * 1024   # conservative: fits v7x (64 MiB) and v5e/v6e (128 MiB)


def _round_up(a, b):
    return (a + b - 1) // b * b


def _choose_tile(n, d):
    """Largest tile whose double-buffered inputs + f32 intermediates fit the budget."""
    n8 = _round_up(max(n, 8), 8)
    if n8 <= 256:
        return n8                        # single tile covers everything
    for t in (512, 384, 256, 128):       # multiples of 128 (lane) and 8 (sublane)
        need = 16 * t * d + 16 * t * t   # 2 inputs x 2 buffers x t*D*4B + ~4 t^2 f32 temps
        if need <= _VMEM_BUDGET:
            return t
    return 128


def _mmd_tile_kernel(itab_ref, jtab_ref, coef_ref, xi_ref, xj_ref,
                     sqi_ref, sqj_ref, wi_ref, wjc_ref, out_ref):
    # itab_ref/jtab_ref: (S,) SMEM  packed step -> (row-tile, col-tile) tables
    # coef_ref: (1,1) SMEM          1 / (largest bandwidth)
    # xi_ref:   (TI, D)             row tile of features
    # xj_ref:   (TJ, D)             column tile of features (same HBM array, j-indexed)
    # sqi_ref:  (TI, 1)             squared row norms (rows)
    # sqj_ref:  (1, TJ)             squared row norms (cols)
    # wi_ref:   (TI, 1)             quadratic-form weights (rows)
    # wjc_ref:  (TJ, 1)             quadratic-form weights (cols, column layout for MXU)
    # out_ref:  (1, 1)              accumulator, resident across the whole grid
    s = pl.program_id(0)

    @pl.when(s == 0)
    def _init():
        out_ref[...] = jnp.zeros_like(out_ref)

    # Gram tile on the MXU, contracting the feature axis of two row tiles (no x^T).
    gram = lax.dot_general(xi_ref[...], xj_ref[...],
                           (((1,), (1,)), ((), ())),
                           preferred_element_type=jnp.float32)
    l2 = jnp.maximum(sqi_ref[...] + sqj_ref[...] - 2.0 * gram, 0.0)

    c = coef_ref[0, 0]  # reciprocal of the LARGEST bandwidth (exact scalar)

    if KERNEL_MUL == 2.0:
        # One EUP pass; the 4 smaller-bandwidth terms via repeated squaring on the VPU.
        t = jnp.exp(-(l2 * c))
        k = t
        for _ in range(KERNEL_NUM - 1):
            t = t * t
            k = k + t
    else:
        k = jnp.zeros_like(l2)
        for i in range(KERNEL_NUM):
            k = k + jnp.exp(-(l2 * (c * KERNEL_MUL ** (KERNEL_NUM - 1 - i))))

    # Quadratic form sum_ab K_ab w_a w_b for this tile; the row reduction rides the
    # MXU ((TI,TJ) @ (TJ,1)), leaving the VPU/XLU free.
    row = jnp.dot(k, wjc_ref[...], preferred_element_type=jnp.float32)   # (TI, 1)
    contrib = jnp.sum(row * wi_ref[...], keepdims=True)                  # (1, 1)

    # Off-diagonal tiles count twice (K symmetric -> block(i,j) == block(j,i)).
    scale = jnp.where(itab_ref[s] == jtab_ref[s], jnp.float32(1.0), jnp.float32(2.0))
    out_ref[...] += scale * contrib


def mmd_loss(subgroup, outputs):
    """subgroup: (N, 1) labels in {0, 1}; outputs: (N, D) float features."""
    x = outputs.astype(jnp.float32)
    N, D = x.shape

    sub = subgroup[:, 0]
    m0 = (sub != 1).astype(jnp.float32)   # source mask (Min_img)
    m1 = (sub != 0).astype(jnp.float32)   # target mask (Maj_img)
    n0 = jnp.sum(m0)
    n1 = jnp.sum(m1)
    # NOTE: like the PyTorch code, an empty group (n0==0 or n1==0) yields NaN.
    w = m0 / n0 - m1 / n1                 # (N,) quadratic-form weights

    # Mean-center (distance preserving) to keep ||xi||^2 + ||xj||^2 - 2 xi.xj well
    # conditioned; pairwise distances and therefore the loss are unchanged.
    xc = x - jnp.mean(x, axis=0, keepdims=True)
    sq = jnp.sum(xc * xc, axis=1)          # (N,) squared row norms
    col_sum = jnp.sum(xc, axis=0)          # (D,)  (~0 after centering; kept for exactness)
    # Exact identity: sum_ij ||x_i - x_j||^2 = 2*N*sum_i ||x_i||^2 - 2*||sum_i x_i||^2
    l2_sum = 2.0 * N * jnp.sum(sq) - 2.0 * jnp.sum(col_sum * col_sum)
    bw = l2_sum / float(N * N - N)
    bw = bw / (KERNEL_MUL ** (KERNEL_NUM // 2))
    # Reciprocal of the LARGEST bandwidth.
    coef = (1.0 / (bw * (KERNEL_MUL ** (KERNEL_NUM - 1)))).reshape(1, 1).astype(jnp.float32)

    # Tiling / padding. Padded rows get zero features and zero weight, so they
    # contribute nothing; the bandwidth above uses unpadded data.
    tile = _choose_tile(N, D)
    n_pad = _round_up(N, tile)
    pad = n_pad - N

    x_p = jnp.pad(xc, ((0, pad), (0, 0)))
    sq_p = jnp.pad(sq, (0, pad))
    w_p = jnp.pad(w, (0, pad))
    sq_col = sq_p.reshape(n_pad, 1)
    sq_row = sq_p.reshape(1, n_pad)
    w_col = w_p.reshape(n_pad, 1)

    # Packed upper-triangular tile enumeration (static).
    T = n_pad // tile
    pairs = [(i, j) for i in range(T) for j in range(i, T)]
    itab = jnp.array([p[0] for p in pairs], dtype=jnp.int32)
    jtab = jnp.array([p[1] for p in pairs], dtype=jnp.int32)
    num_steps = len(pairs)

    # VMEM limit = computed need + slack (never a flat 48 MiB; stays under v7x's 64 MiB).
    need = 16 * tile * D + 16 * tile * tile + (1 << 20)
    vmem_limit = int(min(max(need, 16 * 1024 * 1024), 60 * 1024 * 1024))

    res = pl.pallas_call(
        _mmd_tile_kernel,
        out_shape=jax.ShapeDtypeStruct((1, 1), jnp.float32),
        grid_spec=pltpu.PrefetchScalarGridSpec(
            num_scalar_prefetch=2,
            grid=(num_steps,),
            in_specs=[
                pl.BlockSpec(memory_space=pltpu.MemorySpace.SMEM),            # coef scalar
                pl.BlockSpec((tile, D), lambda s, it, jt: (it[s], 0)),        # x rows (i)
                pl.BlockSpec((tile, D), lambda s, it, jt: (jt[s], 0)),        # x rows (j)
                pl.BlockSpec((tile, 1), lambda s, it, jt: (it[s], 0)),        # sq norms (rows)
                pl.BlockSpec((1, tile), lambda s, it, jt: (0, jt[s])),        # sq norms (cols)
                pl.BlockSpec((tile, 1), lambda s, it, jt: (it[s], 0)),        # weights (rows)
                pl.BlockSpec((tile, 1), lambda s, it, jt: (jt[s], 0)),        # weights (cols)
            ],
            out_specs=pl.BlockSpec((1, 1), lambda s, it, jt: (0, 0)),
        ),
        compiler_params=pltpu.CompilerParams(
            # Single packed axis feeds one resident (1,1) accumulator block.
            dimension_semantics=("arbitrary",),
            vmem_limit_bytes=vmem_limit,
        ),
    )(itab, jtab, coef, x_p, x_p, sq_col, sq_row, w_col, w_col)
    return res[0, 0]


def _mmd_ref(subgroup, outputs):
    """Pure-numpy reference that mimics the PyTorch forward literally."""
    sub = np.asarray(subgroup)[:, 0]
    x = np.asarray(outputs, dtype=np.float32)
    src = x[sub != 1]          # Min_img
    tgt = x[sub != 0]          # Maj_img
    total = np.concatenate([src, tgt], axis=0)
    n = total.shape[0]
    l2 = ((total[None, :, :] - total[:, None, :]) ** 2).sum(-1)
    bw = l2.sum() / (n * n - n)
    bw = bw / (KERNEL_MUL ** (KERNEL_NUM // 2))
    k = sum(np.exp(-l2 / (bw * KERNEL_MUL ** i)) for i in range(KERNEL_NUM))
    bs = src.shape[0]
    return (k[:bs, :bs].mean() + k[bs:, bs:].mean()
            - k[:bs, bs:].mean() - k[bs:, :bs].mean())


if __name__ == "__main__":
    key = jax.random.PRNGKey(0)
    N, D = 8, 32
    outputs = jax.random.normal(key, (N, D), dtype=jnp.float32)
    # deterministic subgroup labels: 4 "minority" (0) and 4 "majority" (1) samples
    subgroup = jnp.array([0, 1, 0, 1, 1, 0, 1, 0], dtype=jnp.float32).reshape(N, 1)

    loss = jax.block_until_ready(mmd_loss(subgroup, outputs))

    ref = _mmd_ref(np.asarray(subgroup), np.asarray(outputs))
    assert abs(float(loss) - float(ref)) < 1e-3, (float(loss), float(ref))
    print("KERNEL_OK")
</pallas_src>

<mosaic_0001>
module attributes {stable_mosaic.version = 11 : i64} {
  func.func @_mmd_tile_kernel(%arg0: i32, %arg1: memref<1xi32, #tpu.memory_space<smem>>, %arg2: memref<1xi32, #tpu.memory_space<smem>>, %arg3: memref<1x1xf32, #tpu.memory_space<smem>>, %arg4: memref<8x32xf32, #tpu.memory_space<vmem>>, %arg5: memref<8x32xf32, #tpu.memory_space<vmem>>, %arg6: memref<8x1xf32, #tpu.memory_space<vmem>>, %arg7: memref<1x8xf32, #tpu.memory_space<vmem>>, %arg8: memref<8x1xf32, #tpu.memory_space<vmem>>, %arg9: memref<8x1xf32, #tpu.memory_space<vmem>>, %arg10: memref<1x1xf32, #tpu.memory_space<vmem>>) attributes {dimension_semantics = [#tpu.dimension_semantics<arbitrary>], iteration_bounds = array<i64: 1>, scalar_prefetch = 2 : i64, scratch_operands = 0 : i64, tpu.core_type = #tpu.core_type<tc>, window_params = [{transform_indices = @transform_0, window_bounds = array<i64: 1, 1>}, {transform_indices = @transform_1, window_bounds = array<i64: 8, 32>}, {transform_indices = @transform_2, window_bounds = array<i64: 8, 32>}, {transform_indices = @transform_3, window_bounds = array<i64: 8, 1>}, {transform_indices = @transform_4, window_bounds = array<i64: 1, 8>}, {transform_indices = @transform_5, window_bounds = array<i64: 8, 1>}, {transform_indices = @transform_6, window_bounds = array<i64: 8, 1>}, {pipeline_mode = #tpu.pipeline_mode<synchronous>, transform_indices = @transform_7, window_bounds = array<i64: 1, 1>}]} {
    %c0_i32 = arith.constant 0 : i32
    %0 = arith.cmpi eq, %arg0, %c0_i32 : i32
    %1 = arith.extui %0 : i1 to i32
    %c0_i32_0 = arith.constant 0 : i32
    %2 = arith.cmpi ne, %1, %c0_i32_0 : i32
    scf.if %2 {
      %cst_25 = arith.constant 0.000000e+00 : f32
      %50 = vector.broadcast %cst_25 : f32 to vector<1x1xf32>
      %c0_26 = arith.constant 0 : index
      %c0_27 = arith.constant 0 : index
      %51 = vector.load %arg10[%c0_26, %c0_27] : memref<1x1xf32, #tpu.memory_space<vmem>>, vector<1x1xf32>
      tpu.vector_store %arg10[%c0_26, %c0_27], %50 {strides = array<i32>} : memref<1x1xf32, #tpu.memory_space<vmem>>, vector<1x1xf32>,
    } else {
    }
    %c0 = arith.constant 0 : index
    %c0_1 = arith.constant 0 : index
    %3 = vector.load %arg4[%c0, %c0_1] : memref<8x32xf32, #tpu.memory_space<vmem>>, vector<8x32xf32>
    %c0_2 = arith.constant 0 : index
    %c0_3 = arith.constant 0 : index
    %4 = vector.load %arg5[%c0_2, %c0_3] : memref<8x32xf32, #tpu.memory_space<vmem>>, vector<8x32xf32>
    %cst = arith.constant dense<0.000000e+00> : vector<8x8xf32>
    %5 = tpu.matmul %3, %4, %cst {dimension_numbers = #tpu.dot_dimension_numbers<[1], [1], [0], [0], [0, 0, 1, 0], [], []>} : vector<8x32xf32>, vector<8x32xf32>, vector<8x8xf32> -> vector<8x8xf32>
    %c0_4 = arith.constant 0 : index
    %c0_5 = arith.constant 0 : index
    %6 = vector.load %arg6[%c0_4, %c0_5] : memref<8x1xf32, #tpu.memory_space<vmem>>, vector<8x1xf32>
    %c0_6 = arith.constant 0 : index
    %c0_7 = arith.constant 0 : index
    %7 = vector.load %arg7[%c0_6, %c0_7] : memref<1x8xf32, #tpu.memory_space<vmem>>, vector<1x8xf32>
    %8 = vector.broadcast %6 : vector<8x1xf32> to vector<8x8xf32>
    %9 = vector.broadcast %7 : vector<1x8xf32> to vector<8x8xf32>
    %10 = arith.addf %8, %9 : vector<8x8xf32>
    %cst_8 = arith.constant 2.000000e+00 : f32
    %11 = vector.broadcast %cst_8 : f32 to vector<8x8xf32>
    %12 = arith.mulf %11, %5 : vector<8x8xf32>
    %13 = arith.subf %10, %12 : vector<8x8xf32>
    %cst_9 = arith.constant 0.000000e+00 : f32
    %14 = vector.broadcast %cst_9 : f32 to vector<8x8xf32>
    %15 = arith.maximumf %13, %14 : vector<8x8xf32>
    %c0_10 = arith.constant 0 : index
    %c0_11 = arith.constant 0 : index
    %16 = memref.load %arg3[%c0_10, %c0_11] : memref<1x1xf32, #tpu.memory_space<smem>>
    %17 = vector.broadcast %16 : f32 to vector<8x8xf32>
    %18 = arith.mulf %15, %17 : vector<8x8xf32>
    %cst_12 = arith.constant 0.000000e+00 : f32
    %19 = vector.broadcast %cst_12 : f32 to vector<8x8xf32>
    %20 = arith.subf %19, %18 : vector<8x8xf32>
    %21 = math.exp %20 : vector<8x8xf32>
    %22 = arith.mulf %21, %21 : vector<8x8xf32>
    %23 = arith.addf %21, %22 : vector<8x8xf32>
    %24 = arith.mulf %22, %22 : vector<8x8xf32>
    %25 = arith.addf %23, %24 : vector<8x8xf32>
    %26 = arith.mulf %24, %24 : vector<8x8xf32>
    %27 = arith.addf %25, %26 : vector<8x8xf32>
    %28 = arith.mulf %26, %26 : vector<8x8xf32>
    %29 = arith.addf %27, %28 : vector<8x8xf32>
    %c0_13 = arith.constant 0 : index
    %c0_14 = arith.constant 0 : index
    %30 = vector.load %arg9[%c0_13, %c0_14] : memref<8x1xf32, #tpu.memory_space<vmem>>, vector<8x1xf32>
    %cst_15 = arith.constant dense<0.000000e+00> : vector<8x1xf32>
    %31 = tpu.matmul %29, %30, %cst_15 {dimension_numbers = #tpu.dot_dimension_numbers<[1], [0], [0], [1], [0, 0, 1, 1], [], []>} : vector<8x8xf32>, vector<8x1xf32>, vector<8x1xf32> -> vector<8x1xf32>
    %c0_16 = arith.constant 0 : index
    %c0_17 = arith.constant 0 : index
    %32 = vector.load %arg8[%c0_16, %c0_17] : memref<8x1xf32, #tpu.memory_space<vmem>>, vector<8x1xf32>
    %33 = arith.mulf %31, %32 : vector<8x1xf32>
    %34 = vector.shape_cast %33 : vector<8x1xf32> to vector<1x8x1xf32>
    %cst_18 = arith.constant dense<0.000000e+00> : vector<1xf32>
    %35 = vector.multi_reduction <add>, %34, %cst_18 [1, 2] : vector<1x8x1xf32> to vector<1xf32>
    %36 = vector.shape_cast %35 : vector<1xf32> to vector<1x1x1xf32>
    %37 = vector.extract %36[0, 0, 0] : f32 from vector<1x1x1xf32>
    %38 = vector.broadcast %37 : f32 to vector<1x1xf32>
    %39 = arith.index_cast %arg0 : i32 to index
    %40 = memref.load %arg1[%39] : memref<1xi32, #tpu.memory_space<smem>>
    %41 = arith.index_cast %arg0 : i32 to index
    %42 = memref.load %arg2[%41] : memref<1xi32, #tpu.memory_space<smem>>
    %43 = arith.cmpi eq, %40, %42 : i32
    %cst_19 = arith.constant 1.000000e+00 : f32
    %cst_20 = arith.constant 2.000000e+00 : f32
    %44 = arith.select %43, %cst_19, %cst_20 : f32
    %c0_21 = arith.constant 0 : index
    %c0_22 = arith.constant 0 : index
    %45 = vector.load %arg10[%c0_21, %c0_22] : memref<1x1xf32, #tpu.memory_space<vmem>>, vector<1x1xf32>
    %46 = vector.broadcast %44 : f32 to vector<1x1xf32>
    %47 = arith.mulf %46, %38 : vector<1x1xf32>
    %48 = arith.addf %45, %47 : vector<1x1xf32>
    %c0_23 = arith.constant 0 : index
    %c0_24 = arith.constant 0 : index
    %49 = vector.load %arg10[%c0_23, %c0_24] : memref<1x1xf32, #tpu.memory_space<vmem>>, vector<1x1xf32>
    tpu.vector_store %arg10[%c0_23, %c0_24], %48 {strides = array<i32>} : memref<1x1xf32, #tpu.memory_space<vmem>>, vector<1x1xf32>,
    return
  }
  func.func @transform_0(%arg0: i32, %arg1: memref<1xi32, #tpu.memory_space<smem>>, %arg2: memref<1xi32, #tpu.memory_space<smem>>) -> (i32, i32) {
    %c0_i32 = arith.constant 0 : i32
    %c0_i32_0 = arith.constant 0 : i32
    %c0_i32_1 = arith.constant 0 : i32
    return %c0_i32, %c0_i32_0 : i32, i32
  }
  func.func @transform_1(%arg0: i32, %arg1: memref<1xi32, #tpu.memory_space<smem>>, %arg2: memref<1xi32, #tpu.memory_space<smem>>) -> (i32, i32) {
    %0 = arith.index_cast %arg0 : i32 to index
    %1 = memref.load %arg1[%0] : memref<1xi32, #tpu.memory_space<smem>>
    %c0_i32 = arith.constant 0 : i32
    %c0_i32_0 = arith.constant 0 : i32
    return %1, %c0_i32 : i32, i32
  }
  func.func @transform_2(%arg0: i32, %arg1: memref<1xi32, #tpu.memory_space<smem>>, %arg2: memref<1xi32, #tpu.memory_space<smem>>) -> (i32, i32) {
    %0 = arith.index_cast %arg0 : i32 to index
    %1 = memref.load %arg2[%0] : memref<1xi32, #tpu.memory_space<smem>>
    %c0_i32 = arith.constant 0 : i32
    %c0_i32_0 = arith.constant 0 : i32
    return %1, %c0_i32 : i32, i32
  }
  func.func @transform_3(%arg0: i32, %arg1: memref<1xi32, #tpu.memory_space<smem>>, %arg2: memref<1xi32, #tpu.memory_space<smem>>) -> (i32, i32) {
    %0 = arith.index_cast %arg0 : i32 to index
    %1 = memref.load %arg1[%0] : memref<1xi32, #tpu.memory_space<smem>>
    %c0_i32 = arith.constant 0 : i32
    %c0_i32_0 = arith.constant 0 : i32
    return %1, %c0_i32 : i32, i32
  }
  func.func @transform_4(%arg0: i32, %arg1: memref<1xi32, #tpu.memory_space<smem>>, %arg2: memref<1xi32, #tpu.memory_space<smem>>) -> (i32, i32) {
    %0 = arith.index_cast %arg0 : i32 to index
    %1 = memref.load %arg2[%0] : memref<1xi32, #tpu.memory_space<smem>>
    %c0_i32 = arith.constant 0 : i32
    %c0_i32_0 = arith.constant 0 : i32
    return %c0_i32, %1 : i32, i32
  }
  func.func @transform_5(%arg0: i32, %arg1: memref<1xi32, #tpu.memory_space<smem>>, %arg2: memref<1xi32, #tpu.memory_space<smem>>) -> (i32, i32) {
    %0 = arith.index_cast %arg0 : i32 to index
    %1 = memref.load %arg1[%0] : memref<1xi32, #tpu.memory_space<smem>>
    %c0_i32 = arith.constant 0 : i32
    %c0_i32_0 = arith.constant 0 : i32
    return %1, %c0_i32 : i32, i32
  }
  func.func @transform_6(%arg0: i32, %arg1: memref<1xi32, #tpu.memory_space<smem>>, %arg2: memref<1xi32, #tpu.memory_space<smem>>) -> (i32, i32) {
    %0 = arith.index_cast %arg0 : i32 to index
    %1 = memref.load %arg2[%0] : memref<1xi32, #tpu.memory_space<smem>>
    %c0_i32 = arith.constant 0 : i32
    %c0_i32_0 = arith.constant 0 : i32
    return %1, %c0_i32 : i32, i32
  }
  func.func @transform_7(%arg0: i32, %arg1: memref<1xi32, #tpu.memory_space<smem>>, %arg2: memref<1xi32, #tpu.memory_space<smem>>) -> (i32, i32) {
    %c0_i32 = arith.constant 0 : i32
    %c0_i32_0 = arith.constant 0 : i32
    %c0_i32_1 = arith.constant 0 : i32
    return %c0_i32, %c0_i32_0 : i32, i32
  }
}

</mosaic_0001>

<llo_original>
// kernel: tpu_custom_call.1
$region0: #{tpu_custom_call.1}
  #allocation0 [shape = 'u32[]', space=smem, size = 0x4, offset = 0x4, fixed_abs, tag = 'smem constant byte address 0x4 - core index']
  #allocation1 [shape = 'u32[144,128]{1,0:T(1,128)}', space=vmem, size = 0x12000, scoped, tag = 'internal scratch']
  #allocation2 [shape = 's32[1]{0}', space=sflag, size = 0x4, scoped, tag = 'scoped memory for tpu_custom_call.1']
  #allocation3 [shape = 's32[1]{0:T(128)S(6)}', space=smem, size = 0x200, scoped, tag = 'prefetched SMEM operand 0']
  #allocation4 [shape = 's32[1]{0:T(128)S(6)}', space=smem, size = 0x200, scoped, tag = 'prefetched SMEM operand 1']
  #allocation5 [shape = 'f32[1,1]{1,0:T(1,128)S(6)}', space=smem, size = 0x200, scoped, tag = 'scoped memory for tpu_custom_call.1']
  %s0 = inlined_call_operand.<no memory space> [shape: s32[1], index: 0, kind: input, shape index: {}]
  %s1 = inlined_call_operand.<no memory space> [shape: s32[1], index: 1, kind: input, shape index: {}]
  %s2 = inlined_call_operand.<no memory space> [shape: f32[1,1], index: 2, kind: input, shape index: {}]
  %s3 = inlined_call_operand.vmem [shape: f32[8,32], index: 3, kind: input, shape index: {}]
  %s4 = inlined_call_operand.vmem [shape: f32[8,32], index: 4, kind: input, shape index: {}]
  %s5 = inlined_call_operand.vmem [shape: f32[8,1], index: 5, kind: input, shape index: {}]
  %s6 = inlined_call_operand.vmem [shape: f32[1,8], index: 6, kind: input, shape index: {}]
  %s7 = inlined_call_operand.vmem [shape: f32[8,1], index: 7, kind: input, shape index: {}]
  %s8 = inlined_call_operand.vmem [shape: f32[8,1], index: 8, kind: input, shape index: {}]
  %s9 = inlined_call_operand.hbm [shape: f32[1,1], index: 9, kind: output, shape index: {}]
  %s10 = sld [smem:[#allocation0]]
  $region42: #{tpu_custom_call.1} parent=0
    _
  %s12 = ssub.s32 1, %s10
  %s13 = scalar_select 0, %s12, %s10
  %14 = sst [smem:[#allocation3]] %s0
  %15 = sst [smem:[#allocation4]] %s1
  %16 = sst [smem:[#allocation5]] %s2
  $region1: #{tpu_custom_call.1} parent=0
    #allocation6 [shape = 'u8[512]{0}', space=vmem, size = 0x400, scoped, tag = 'output window, operand 0, single buffered']
    #allocation7 [shape = 's32[1]{0}', space=sflag, size = 0x4, scoped, tag = 'scoped memory for tpu_custom_call.1']
    %17 = vsyncpa [#allocation7], 0
    // Predicated region
    $region2: #{tpu_custom_call.1} parent=1 // pred_check
      _
    $region3: #{tpu_custom_call.1} parent=1 // pred_check_branch
      %19 = sbr.rel (0) target = $region5
    $region4: #{tpu_custom_call.1} parent=1 // pred_region
      _
    $region5: #{tpu_custom_call.1} parent=1 // pred_fallthru
      _
    // Predicated region
    $region6: #{tpu_custom_call.1} parent=1 // pred_check
      _
    $region7: #{tpu_custom_call.1} parent=1 // pred_check_branch
      %21 = sbr.rel (0) target = $region9
    $region8: #{tpu_custom_call.1} parent=1 // pred_region
      %s22 = sld [smem:[#allocation3]]
      %p23 = scmp.lt.s32.totalorder %s22, 0
      %s24 = scalar_select %p23, %s22, 0
      %s25 = smul.addr %s24, 8
      %s26 = scalar_lea.vmem %s3, %s25
      %s27 = sld [smem:[#allocation3]]
    $region9: #{tpu_custom_call.1} parent=1 // pred_fallthru
      _
    // Predicated region
    $region10: #{tpu_custom_call.1} parent=1 // pred_check
      _
    $region11: #{tpu_custom_call.1} parent=1 // pred_check_branch
      %29 = sbr.rel (0) target = $region13
    $region12: #{tpu_custom_call.1} parent=1 // pred_region
      %s30 = sld [smem:[#allocation4]]
      %p31 = scmp.lt.s32.totalorder %s30, 0
      %s32 = scalar_select %p31, %s30, 0
      %s33 = smul.addr %s32, 8
      %s34 = scalar_lea.vmem %s4, %s33
      %s35 = sld [smem:[#allocation4]]
    $region13: #{tpu_custom_call.1} parent=1 // pred_fallthru
      _
    // Predicated region
    $region14: #{tpu_custom_call.1} parent=1 // pred_check
      _
    $region15: #{tpu_custom_call.1} parent=1 // pred_check_branch
      %37 = sbr.rel (0) target = $region17
    $region16: #{tpu_custom_call.1} parent=1 // pred_region
      %s38 = sld [smem:[#allocation3]]
      %p39 = scmp.lt.s32.totalorder %s38, 0
      %s40 = scalar_select %p39, %s38, 0
      %s41 = smul.addr %s40, 8
      %s42 = scalar_lea.vmem %s5, %s41
      %s43 = sld [smem:[#allocation3]]
    $region17: #{tpu_custom_call.1} parent=1 // pred_fallthru
      _
    // Predicated region
    $region18: #{tpu_custom_call.1} parent=1 // pred_check
      _
    $region19: #{tpu_custom_call.1} parent=1 // pred_check_branch
      %45 = sbr.rel (0) target = $region21
    $region20: #{tpu_custom_call.1} parent=1 // pred_region
      %s46 = sld [smem:[#allocation4]]
      %p47 = scmp.lt.s32.totalorder %s46, 0
      %s48 = scalar_select %p47, %s46, 0
      %s49 = scalar_lea.vmem %s6, %s48
      %s50 = sld [smem:[#allocation4]]
    $region21: #{tpu_custom_call.1} parent=1 // pred_fallthru
      _
    // Predicated region
    $region22: #{tpu_custom_call.1} parent=1 // pred_check
      _
    $region23: #{tpu_custom_call.1} parent=1 // pred_check_branch
      %52 = sbr.rel (0) target = $region25
    $region24: #{tpu_custom_call.1} parent=1 // pred_region
      %s53 = sld [smem:[#allocation3]]
      %p54 = scmp.lt.s32.totalorder %s53, 0
      %s55 = scalar_select %p54, %s53, 0
      %s56 = smul.addr %s55, 8
      %s57 = scalar_lea.vmem %s7, %s56
      %s58 = sld [smem:[#allocation3]]
    $region25: #{tpu_custom_call.1} parent=1 // pred_fallthru
      _
    // Predicated region
    $region26: #{tpu_custom_call.1} parent=1 // pred_check
      _
    $region27: #{tpu_custom_call.1} parent=1 // pred_check_branch
      %60 = sbr.rel (0) target = $region29
    $region28: #{tpu_custom_call.1} parent=1 // pred_region
      %s61 = sld [smem:[#allocation4]]
      %p62 = scmp.lt.s32.totalorder %s61, 0
      %s63 = scalar_select %p62, %s61, 0
      %s64 = smul.addr %s63, 8
      %s65 = scalar_lea.vmem %s8, %s64
      %s66 = sld [smem:[#allocation4]]
    $region29: #{tpu_custom_call.1} parent=1 // pred_fallthru
      _
    %s67 = sld [smem:[#allocation3]]
    %p68 = scmp.lt.s32.totalorder %s67, 0
    %s69 = scalar_select %p68, %s67, 0
    %s70 = smul.addr %s69, 8
    %s71 = scalar_lea.vmem %s3, %s70
    %s72 = sld [smem:[#allocation4]]
    %p73 = scmp.lt.s32.totalorder %s72, 0
    %s74 = scalar_select %p73, %s72, 0
    %s75 = smul.addr %s74, 8
    %s76 = scalar_lea.vmem %s4, %s75
    %s77 = sld [smem:[#allocation3]]
    %p78 = scmp.lt.s32.totalorder %s77, 0
    %s79 = scalar_select %p78, %s77, 0
    %s80 = smul.addr %s79, 8
    %s81 = scalar_lea.vmem %s5, %s80
    %s82 = sld [smem:[#allocation4]]
    %p83 = scmp.lt.s32.totalorder %s82, 0
    %s84 = scalar_select %p83, %s82, 0
    %s85 = scalar_lea.vmem %s6, %s84
    %s86 = sld [smem:[#allocation3]]
    %p87 = scmp.lt.s32.totalorder %s86, 0
    %s88 = scalar_select %p87, %s86, 0
    %s89 = smul.addr %s88, 8
    %s90 = scalar_lea.vmem %s7, %s89
    %s91 = sld [smem:[#allocation4]]
    %p92 = scmp.lt.s32.totalorder %s91, 0
    %s93 = scalar_select %p92, %s91, 0
    %s94 = smul.addr %s93, 8
    %s95 = scalar_lea.vmem %s8, %s94
    %s96 = sld [smem:[#allocation3]]
    %p97 = scmp.lt.s32.totalorder %s96, 0
    %s98 = scalar_select %p97, %s96, 0
    %s99 = smul.addr %s98, 8
    %s100 = scalar_lea.vmem %s3, %s99
    %s101 = sld [smem:[#allocation3]]
    %s102 = sld [smem:[#allocation4]]
    %p103 = scmp.lt.s32.totalorder %s102, 0
    %s104 = scalar_select %p103, %s102, 0
    %s105 = smul.addr %s104, 8
    %s106 = scalar_lea.vmem %s4, %s105
    %s107 = sld [smem:[#allocation4]]
    %s108 = sld [smem:[#allocation3]]
    %p109 = scmp.lt.s32.totalorder %s108, 0
    %s110 = scalar_select %p109, %s108, 0
    %s111 = smul.addr %s110, 8
    %s112 = scalar_lea.vmem %s5, %s111
    %s113 = sld [smem:[#allocation3]]
    %s114 = sld [smem:[#allocation4]]
    %p115 = scmp.lt.s32.totalorder %s114, 0
    %s116 = scalar_select %p115, %s114, 0
    %s117 = scalar_lea.vmem %s6, %s116
    %s118 = sld [smem:[#allocation4]]
    %s119 = sld [smem:[#allocation3]]
    %p120 = scmp.lt.s32.totalorder %s119, 0
    %s121 = scalar_select %p120, %s119, 0
    %s122 = smul.addr %s121, 8
    %s123 = scalar_lea.vmem %s7, %s122
    %s124 = sld [smem:[#allocation3]]
    %s125 = sld [smem:[#allocation4]]
    %p126 = scmp.lt.s32.totalorder %s125, 0
    %s127 = scalar_select %p126, %s125, 0
    %s128 = smul.addr %s127, 8
    %s129 = scalar_lea.vmem %s8, %s128
    %s130 = sld [smem:[#allocation4]]
    %p131 = scmp.eq.s32.totalorder 0, 0
    // Predicated region
    $region30: #{tpu_custom_call.1} parent=1 // pred_check
      %p132 = pneg %p131
    $region31: #{tpu_custom_call.1} parent=1 // pred_check_branch
      %134 = sbr.rel (%p132) target = $region33
    $region32: #{tpu_custom_call.1} parent=1 // pred_region
      %vm135 = vcmask 0
      %136 = vst.msk [vmem:[#allocation6] sm:$0x1] %vm135, 0.0
    $region33: #{tpu_custom_call.1} parent=1 // pred_fallthru
      _
    %v137 = vld [vmem:[%s100] sm:$0xff]
    %v138 = vld [vmem:[%s106] sm:$0xff]
    %vm139 = vcmask 261120
    %v141 = vsel %vm139, %v137, 0
    %v144 = vsel %vm139, %v138, 0
    %146 = vmatprep.subr.mxu0 0.0
    %147 = vmatpush1.xpose.msra.mxu0 0.0
    %148 = vmatprep.subr.mxu0 0.0
    %149 = vmatpush1.xpose.msra.mxu0 0.0
    %150 = vmatprep.subr.mxu0 0.0
    %151 = vmatpush1.xpose.msra.mxu0 0.0
    %152 = vmatprep.subr.mxu0 0.0
    %153 = vmatpush1.xpose.msra.mxu0 0.0
    %154 = vmatprep.subr.mxu0 0.0
    %155 = vmatpush1.xpose.msra.mxu0 0.0
    %156 = vmatprep.subr.mxu0 0.0
    %157 = vmatpush1.xpose.msra.mxu0 0.0
    %158 = vmatprep.subr.mxu0 0.0
    %159 = vmatpush1.xpose.msra.mxu0 0.0
    %160 = vmatprep.subr.mxu0 0.0
    %161 = vmatpush1.xpose.msra.mxu0 0.0
    %162 = vmatprep.subr.mxu0 0.0
    %163 = vmatpush1.xpose.msra.mxu0 0.0
    %164 = vmatprep.subr.mxu0 0.0
    %165 = vmatpush1.xpose.msra.mxu0 0.0
    %166 = vmatprep.subr.mxu0 0.0
    %167 = vmatpush1.xpose.msra.mxu0 0.0
    %168 = vmatprep.subr.mxu0 0.0
    %169 = vmatpush1.xpose.msra.mxu0 0.0
    %170 = vmatprep.subr.mxu0 0.0
    %171 = vmatpush1.xpose.msra.mxu0 0.0
    %172 = vmatprep.subr.mxu0 0.0
    %173 = vmatpush1.xpose.msra.mxu0 0.0
    %174 = vmatprep.subr.mxu0 0.0
    %175 = vmatpush1.xpose.msra.mxu0 0.0
    %176 = vmatprep.subr.mxu0 0.0
    %177 = vmatpush1.xpose.msra.mxu0 %v144
    %178 = vmatprep.subr.mxu0 0.0
    %179 = vmatpush2.xpose.msra.mxu0 0.0
    %180 = vmatprep.subr.mxu0 0.0
    %181 = vmatpush2.xpose.msra.mxu0 0.0
    %182 = vmatprep.subr.mxu0 0.0
    %183 = vmatpush2.xpose.msra.mxu0 0.0
    %184 = vmatprep.subr.mxu0 0.0
    %185 = vmatpush2.xpose.msra.mxu0 0.0
    %186 = vmatprep.subr.mxu0 0.0
    %187 = vmatpush2.xpose.msra.mxu0 0.0
    %188 = vmatprep.subr.mxu0 0.0
    %189 = vmatpush2.xpose.msra.mxu0 0.0
    %190 = vmatprep.subr.mxu0 0.0
    %191 = vmatpush2.xpose.msra.mxu0 0.0
    %192 = vmatprep.subr.mxu0 0.0
    %193 = vmatpush2.xpose.msra.mxu0 0.0
    %194 = vmatprep.subr.mxu0 0.0
    %195 = vmatpush2.xpose.msra.mxu0 0.0
    %196 = vmatprep.subr.mxu0 0.0
    %197 = vmatpush2.xpose.msra.mxu0 0.0
    %198 = vmatprep.subr.mxu0 0.0
    %199 = vmatpush2.xpose.msra.mxu0 0.0
    %200 = vmatprep.subr.mxu0 0.0
    %201 = vmatpush2.xpose.msra.mxu0 0.0
    %202 = vmatprep.subr.mxu0 0.0
    %203 = vmatpush2.xpose.msra.mxu0 0.0
    %204 = vmatprep.subr.mxu0 0.0
    %205 = vmatpush2.xpose.msra.mxu0 0.0
    %206 = vmatprep.subr.mxu0 0.0
    %207 = vmatpush2.xpose.msra.mxu0 0.0
    %208 = vmatprep.subr.mxu0 0.0
    %209 = vmatpush2.xpose.msra.mxu0 0.0
    %210 = vmatprep.mubr.f32.mxu0 0.0
    %211 = vmatmul.mubr.f32.gmra.mxu0 %v141
    %v212 = vpop.f32.mrf.mxu0
    %v213 = vadd.f32 0.0, %v212
    %v214 = vpop.f32.mrf.mxu0
    %215 = vdwg.mxu0
    %v216 = vld [vmem:[%s112] sm:$0xff]
    %v217 = vld [vmem:[%s117] sm:$0x1]
    %219 = vset.pattern.permute.xlu0 0
    %220 = vperm.xlu0 %219, %v216
    %v221 = vpop.permute.xlu0 %220
    %v224 = vlaneseq
    %v225 = vshrl.u32 %v224, 7
    %v226 = vsub.s32 0, %v225
    %v227 = vrot.slane %v217, %v226
    %v229 = vadd.f32 %v221, %v227
    %v230 = vmul.f32 %v213, 2.0
    %v231 = vsub.f32 %v229, %v230
    %v232 = vmax.f32 %v231, 0.0
    %s233 = sld [smem:[#allocation5]]
    %v234 = vstv %s233
    %v235 = vmul.f32 %v232, %v234
    %v236 = vsub.f32 0.0, %v235
    %v237 = vmul.f32 %v236, 1.442695
    %v238 = vpow.pop %v237
    %v239 = vmul.f32 %v238, %v238
    %v240 = vadd.f32 %v238, %v239
    %v241 = vmul.f32 %v239, %v239
    %v242 = vadd.f32 %v240, %v241
    %v243 = vmul.f32 %v241, %v241
    %v244 = vadd.f32 %v242, %v243
    %v245 = vmul.f32 %v243, %v243
    %v246 = vadd.f32 %v244, %v245
    %v247 = vld [vmem:[%s129] sm:$0xff]
    %vm248 = vcmask 64512
    %v250 = vsel %vm248, %v246, 0
    %252 = vmatprep.subr.mxu0 0.0
    %253 = vmatpush1.msra.mxu0 0.0
    %254 = vmatprep.subr.mxu0 0.0
    %255 = vmatpush1.msra.mxu0 0.0
    %256 = vmatprep.subr.mxu0 0.0
    %257 = vmatpush1.msra.mxu0 0.0
    %258 = vmatprep.subr.mxu0 0.0
    %259 = vmatpush1.msra.mxu0 0.0
    %260 = vmatprep.subr.mxu0 0.0
    %261 = vmatpush1.msra.mxu0 0.0
    %262 = vmatprep.subr.mxu0 0.0
    %263 = vmatpush1.msra.mxu0 0.0
    %264 = vmatprep.subr.mxu0 0.0
    %265 = vmatpush1.msra.mxu0 0.0
    %266 = vmatprep.subr.mxu0 0.0
    %267 = vmatpush1.msra.mxu0 0.0
    %268 = vmatprep.subr.mxu0 0.0
    %269 = vmatpush1.msra.mxu0 0.0
    %270 = vmatprep.subr.mxu0 0.0
    %271 = vmatpush1.msra.mxu0 0.0
    %272 = vmatprep.subr.mxu0 0.0
    %273 = vmatpush1.msra.mxu0 0.0
    %274 = vmatprep.subr.mxu0 0.0
    %275 = vmatpush1.msra.mxu0 0.0
    %276 = vmatprep.subr.mxu0 0.0
    %277 = vmatpush1.msra.mxu0 0.0
    %278 = vmatprep.subr.mxu0 0.0
    %279 = vmatpush1.msra.mxu0 0.0
    %280 = vmatprep.subr.mxu0 0.0
    %281 = vmatpush1.msra.mxu0 0.0
    %282 = vmatprep.subr.mxu0 0.0
    %283 = vmatpush1.msra.mxu0 %v247
    %284 = vmatprep.subr.mxu0 0.0
    %285 = vmatpush2.msra.mxu0 0.0
    %286 = vmatprep.subr.mxu0 0.0
    %287 = vmatpush2.msra.mxu0 0.0
    %288 = vmatprep.subr.mxu0 0.0
    %289 = vmatpush2.msra.mxu0 0.0
    %290 = vmatprep.subr.mxu0 0.0
    %291 = vmatpush2.msra.mxu0 0.0
    %292 = vmatprep.subr.mxu0 0.0
    %293 = vmatpush2.msra.mxu0 0.0
    %294 = vmatprep.subr.mxu0 0.0
    %295 = vmatpush2.msra.mxu0 0.0
    %296 = vmatprep.subr.mxu0 0.0
    %297 = vmatpush2.msra.mxu0 0.0
    %298 = vmatprep.subr.mxu0 0.0
    %299 = vmatpush2.msra.mxu0 0.0
    %300 = vmatprep.subr.mxu0 0.0
    %301 = vmatpush2.msra.mxu0 0.0
    %302 = vmatprep.subr.mxu0 0.0
    %303 = vmatpush2.msra.mxu0 0.0
    %304 = vmatprep.subr.mxu0 0.0
    %305 = vmatpush2.msra.mxu0 0.0
    %306 = vmatprep.subr.mxu0 0.0
    %307 = vmatpush2.msra.mxu0 0.0
    %308 = vmatprep.subr.mxu0 0.0
    %309 = vmatpush2.msra.mxu0 0.0
    %310 = vmatprep.subr.mxu0 0.0
    %311 = vmatpush2.msra.mxu0 0.0
    %312 = vmatprep.subr.mxu0 0.0
    %313 = vmatpush2.msra.mxu0 0.0
    %314 = vmatprep.subr.mxu0 0.0
    %315 = vmatpush2.msra.mxu0 0.0
    %316 = vmatprep.mubr.f32.mxu0 0.0
    %317 = vmatmul.mubr.f32.gmra.mxu0 %v250
    %v318 = vpop.f32.mrf.mxu0
    %v319 = vadd.f32 0.0, %v318
    %v320 = vpop.f32.mrf.mxu0
    %321 = vdwg.mxu0
    %v322 = vld [vmem:[%s123] sm:$0xff]
    %v323 = vmul.f32 %v319, %v322
    %vm324 = vcmask 7168
    %v325 = vsel %vm324, %v323, 0.0
    %326 = vadd.xlane.f32.xlu0 %v325
    %v327 = vpop.xlane.xlu0 %326
    %v328 = vrot.slane %v327, 4
    %v329 = vadd.f32 %v327, %v328
    %v330 = vrot.slane %v329, 2
    %v331 = vadd.f32 %v329, %v330
    %v332 = vrot.slane %v331, 1
    %v333 = vadd.f32 %v331, %v332
    %s334 = vtos %v333
    %v335 = vstv %s334
    %s336 = sld [smem:[#allocation3]]
    %s337 = sld [smem:[#allocation4]]
    %p338 = scmp.eq.s32.totalorder %s336, %s337
    %s339 = scalar_select %p338, 1.0, 2.0
    %v340 = vld [vmem:[#allocation6] sm:$0x1]
    %v341 = vstv %s339
    %v342 = vmul.f32 %v341, %v335
    %v343 = vadd.f32 %v340, %v342
    %vm344 = vcmask 0
    %345 = vst.msk [vmem:[#allocation6] sm:$0x1] %vm344, %v343
    // Predicated region
    $region34: #{tpu_custom_call.1} parent=1 // pred_check
      _
    $region35: #{tpu_custom_call.1} parent=1 // pred_check_branch
      %347 = sbr.rel (0) target = $region37
    $region36: #{tpu_custom_call.1} parent=1 // pred_region
      %s349 = ssub.s32 16, 16
      %350 = vsyncadd [#allocation7], %s349
      %s352 = sshll.u32 [#allocation6], 4
      %s353 = int_to_ptr.vmem [resolvable:$true] %s352
      %355 = dma.vmem_to_hbm [thread:$0]  %s353, 16, %s9, [#allocation7]
    $region37: #{tpu_custom_call.1} parent=1 // pred_fallthru
      _
    // Predicated region
    $region38: #{tpu_custom_call.1} parent=1 // pred_check
      _
    $region39: #{tpu_custom_call.1} parent=1 // pred_check_branch
      %357 = sbr.rel (0) target = $region41
    $region40: #{tpu_custom_call.1} parent=1 // pred_region
      %358 = dma.done [#allocation7], 16
    $region41: #{tpu_custom_call.1} parent=1 // pred_fallthru
      _
    %359 = vsyncpa [#allocation7], 1

</llo_original>
